<compile_context>
chip_gen: v7x
topology: tpu7x:2x2x1
jax: 0.10.0
libtpu: 0.0.40
codegen_flags: <defaults>
</compile_context>

<pallas_src>
import jax
import jax.numpy as jnp
import numpy as np
from jax.experimental import pallas as pl
from jax.experimental.pallas import tpu as pltpu

# fdlibm asin coefficients (rational approx over t in [0, 0.25])
_PS0 = 1.66666666666666657415e-01
_PS1 = -3.25565818622400915405e-01
_PS2 = 2.01212532134862925881e-01
_PS3 = -4.00555345006794114027e-02
_PS4 = 7.91534994289814532176e-04
_PS5 = 3.47933107596021167570e-05
_QS1 = -2.40339491173441421878e+00
_QS2 = 2.02094576023350569471e+00
_QS3 = -6.88283971605453293030e-01
_QS4 = 7.70381505559019352791e-02
_HALF_PI = float(np.pi / 2.0)
_EPS = 1e-12  # F.normalize default eps


def _asin01(x):
    """arcsin(x) for x in [0, 1]; single shared rational evaluation."""
    lo = x < 0.5
    # t = x*x (|x|<0.5) or t = (1-x)/2 (|x|>=0.5); both in [0, 0.25], so the
    # rational p(t)/q(t) is evaluated exactly once for both branches.
    t = jnp.where(lo, x * x, (1.0 - x) * 0.5)
    p = t * (_PS0 + t * (_PS1 + t * (_PS2 + t * (_PS3 + t * (_PS4 + t * _PS5)))))
    q = 1.0 + t * (_QS1 + t * (_QS2 + t * (_QS3 + t * _QS4)))
    # q in [~0.51, 1]: EUP vrcp (approx) + one Newton step -> ~2^-23 rel error,
    # divide stays off the VALU slots.
    r0 = pl.reciprocal(q, approx=True)
    rq = r0 * (2.0 - q * r0)
    r = p * rq
    s = jnp.sqrt(t)
    asin_lo = x + x * r
    asin_hi = _HALF_PI - 2.0 * (s + s * r)
    return jnp.where(lo, asin_lo, asin_hi)


def prompt_kernel(x_ref, en_ref, o_ref, acc_ref):
    i = pl.program_id(1)

    @pl.when(i == 0)
    def _init():
        acc_ref[...] = jnp.zeros_like(acc_ref)

    x = x_ref[...].astype(jnp.float32)     # (tile, D), natural layout (bf16 ok)
    en = en_ref[...]                       # (M, D), pre-normalized f32, resident

    # Row sums-of-squares of x produced directly in (1, tile) lane-dense
    # orientation via an MXU ones-row contraction (MXU is otherwise idle);
    # avoids any transpose / relayout of the (tile, 1) XLU-reduce result.
    xsq = x * x
    ones_row = jnp.ones((1, x.shape[1]), jnp.float32)
    ssq = jax.lax.dot_general(
        ones_row, xsq, dimension_numbers=(((1,), (1,)), ((), ())),
        preferred_element_type=jnp.float32)                  # (1, tile)
    x_inv = 1.0 / jnp.maximum(jnp.sqrt(ssq), _EPS)           # small exact divide

    # Raw dot on UN-normalized x (transposed-B contraction, q.k^T pattern);
    # fold x's L2 norm into the small (M, tile) output instead of a full-width
    # (tile, D) normalization multiply.
    dot = jax.lax.dot_general(
        en, x, dimension_numbers=(((1,), (1,)), ((), ())),
        preferred_element_type=jnp.float32)                  # (M, tile)
    dot = dot * x_inv

    # ||xn_i - en_j|| / 2 = sqrt(0.5 - 0.5*dot) in [0, 1].  The clip is
    # load-bearing: rounding can push the argument past 1 and the asin
    # hi-branch sqrt((1-x)/2) would go NaN.
    half_chord = jnp.sqrt(jnp.clip(0.5 - 0.5 * dot, 0.0, 1.0))
    dists = 2.0 * jnp.square(_asin01(half_chord))            # (M, tile)

    # Wide accumulator: sublane reduce only per step.
    acc_ref[...] += jnp.sum(dists, axis=0, keepdims=True)    # (1, tile)

    @pl.when(i == pl.num_programs(1) - 1)
    def _finalize():
        # Cross-lane reduction once per core; broadcast the scalar partial sum
        # into this core's (8, 128)-aligned output block.
        o_ref[...] = jnp.zeros(o_ref.shape, o_ref.dtype) + jnp.sum(acc_ref[...])


def _pick_row_tile(n, d, itemsize, budget_bytes=8 << 20):
    """Largest N-tile that divides n, is sublane/lane friendly, and keeps one
    streamed x block within ~8 MiB (so double-buffered blocks + the resident
    embed stay well inside v7x's 64 MiB VMEM; v5e/v6e have more headroom)."""
    if n * d * itemsize <= budget_bytes:
        return n
    max_rows = max(8, budget_bytes // (d * itemsize))
    divisors = set()
    i = 1
    while i * i <= n:
        if n % i == 0:
            divisors.add(i)
            divisors.add(n // i)
        i += 1
    for align in (128, 8):
        cands = [t for t in divisors if t <= max_rows and t % align == 0]
        if cands:
            return max(cands)
    # TODO(synk): ragged N with no aligned divisor -> masked remainder tile.
    return n


def prompt_forward(x, embed, weight=1.0, stop=float('-inf'), row_tile=None):
    """Prompt forward: x (N, D) input embeddings, embed (M, D) prompt embeds."""
    # TODO(synk): replace_grad(dists, maximum(dists, stop)) only alters the
    # backward pass; the forward value ignores `stop`.
    del stop
    n, d = x.shape
    m, d2 = embed.shape
    assert d == d2, (x.shape, embed.shape)

    # embed is tiny and constant across the optimization loop: normalize once
    # here (f32) instead of once per grid step inside the kernel.
    en = embed.astype(jnp.float32)
    en = en / jnp.maximum(jnp.sqrt(jnp.sum(en * en, axis=-1, keepdims=True)), _EPS)

    itemsize = x.dtype.itemsize
    tile = _pick_row_tile(n, d, itemsize) if row_tile is None else row_tile
    assert n % tile == 0, (n, tile)
    n_tiles = n // tile

    # Split the N reduction across both v7x TensorCores when it divides evenly
    # (on 1-TC v5e/v6e the outer "parallel" axis is a harmless sequential loop).
    cores = 2 if (n_tiles % 2 == 0 and n_tiles >= 2) else 1
    tiles_per_core = n_tiles // cores

    grid_spec = pltpu.PrefetchScalarGridSpec(
        num_scalar_prefetch=0,
        grid=(cores, tiles_per_core),
        in_specs=[
            pl.BlockSpec((tile, d), lambda c, i: (c * tiles_per_core + i, 0)),
            pl.BlockSpec((m, d), lambda c, i: (0, 0)),     # embed: resident
        ],
        out_specs=pl.BlockSpec((8, 128), lambda c, i: (c, 0)),
        scratch_shapes=[pltpu.VMEM((1, tile), jnp.float32)],   # wide running sum
    )
    out = pl.pallas_call(
        prompt_kernel,
        grid_spec=grid_spec,
        out_shape=jax.ShapeDtypeStruct((8 * cores, 128), jnp.float32),
        compiler_params=pltpu.CompilerParams(
            dimension_semantics=("parallel", "arbitrary"),
            vmem_limit_bytes=40 << 20),
    )(x, en)

    per_core = out[::8, 0]                       # one broadcast block per core
    # abs(w) * mean(dists * sign(w)) == w * sum(dists_raw) / (N*M)
    return jnp.float32(weight) * (jnp.sum(per_core) * (1.0 / float(n * m)))


def prompt_reference(x, embed, weight=1.0):
    """Pure-JAX mirror of the PyTorch forward (diff-based norm path)."""
    xn = x / jnp.maximum(jnp.linalg.norm(x, axis=-1, keepdims=True), _EPS)
    en = embed / jnp.maximum(jnp.linalg.norm(embed, axis=-1, keepdims=True), _EPS)
    dmat = jnp.linalg.norm(xn[:, None, :] - en[None, :, :], axis=2)
    dists = 2.0 * jnp.arcsin(dmat / 2.0) ** 2
    dists = dists * jnp.sign(jnp.float32(weight))
    return jnp.abs(jnp.float32(weight)) * dists.mean()


if __name__ == "__main__":
    key = jax.random.PRNGKey(0)
    kx, ke = jax.random.split(key)

    N, M, D = 256, 4, 128       # cutout batch, prompt embeds, feature dim
    x = jax.random.normal(kx, (N, D), dtype=jnp.float32)
    embed = jax.random.normal(ke, (M, D), dtype=jnp.float32)
    # Exercise both asin branches and the clip: near-duplicate, exact-duplicate
    # and negated prompt rows placed inside the input batch.
    x = x.at[0].set(embed[0] + 0.01 * x[0])
    x = x.at[1].set(embed[1])
    x = x.at[2].set(-embed[2])

    # Tiled path (grid = (2, 1): exercises the 2-core split + accumulator init)
    # with positive and negative weights.
    for weight in (1.0, -0.7):
        out = jax.block_until_ready(
            prompt_forward(x, embed, weight, float('-inf'), row_tile=128))
        ref = prompt_reference(x, embed, weight)
        np.testing.assert_allclose(np.asarray(out), np.asarray(ref),
                                   rtol=1e-4, atol=1e-5)

    # Default byte-based tiling path (single block, single core).
    out = jax.block_until_ready(prompt_forward(x, embed, 2.5))
    ref = prompt_reference(x, embed, 2.5)
    np.testing.assert_allclose(np.asarray(out), np.asarray(ref),
                               rtol=1e-4, atol=1e-5)

    print("KERNEL_OK")
</pallas_src>

<mosaic_0001>
module attributes {stable_mosaic.version = 11 : i64} {
  func.func @prompt_kernel(%arg0: i32, %arg1: i32, %arg2: memref<128x128xf32, #tpu.memory_space<vmem>>, %arg3: memref<4x128xf32, #tpu.memory_space<vmem>>, %arg4: memref<8x128xf32, #tpu.memory_space<vmem>>, %arg5: memref<1x128xf32, #tpu.memory_space<vmem>>) attributes {dimension_semantics = [#tpu.dimension_semantics<parallel>, #tpu.dimension_semantics<arbitrary>], iteration_bounds = array<i64: 2, 1>, scalar_prefetch = 0 : i64, scratch_operands = 1 : i64, tpu.core_type = #tpu.core_type<tc>, window_params = [{transform_indices = @transform_0, window_bounds = array<i64: 128, 128>}, {pipeline_mode = #tpu.pipeline_mode<synchronous>, transform_indices = @transform_1, window_bounds = array<i64: 4, 128>}, {transform_indices = @transform_2, window_bounds = array<i64: 8, 128>}]} {
    %c0_i32 = arith.constant 0 : i32
    %0 = arith.cmpi eq, %arg1, %c0_i32 : i32
    %1 = arith.extui %0 : i1 to i32
    %c0_i32_0 = arith.constant 0 : i32
    %2 = arith.cmpi ne, %1, %c0_i32_0 : i32
    scf.if %2 {
      %cst_37 = arith.constant 0.000000e+00 : f32
      %90 = vector.broadcast %cst_37 : f32 to vector<1x128xf32>
      %c0_38 = arith.constant 0 : index
      %c0_39 = arith.constant 0 : index
      %91 = vector.load %arg5[%c0_38, %c0_39] : memref<1x128xf32, #tpu.memory_space<vmem>>, vector<1x128xf32>
      tpu.vector_store %arg5[%c0_38, %c0_39], %90 {strides = array<i32>} : memref<1x128xf32, #tpu.memory_space<vmem>>, vector<1x128xf32>,
    } else {
    }
    %c0 = arith.constant 0 : index
    %c0_1 = arith.constant 0 : index
    %3 = vector.load %arg2[%c0, %c0_1] : memref<128x128xf32, #tpu.memory_space<vmem>>, vector<128x128xf32>
    %c0_2 = arith.constant 0 : index
    %c0_3 = arith.constant 0 : index
    %4 = vector.load %arg3[%c0_2, %c0_3] : memref<4x128xf32, #tpu.memory_space<vmem>>, vector<4x128xf32>
    %5 = arith.mulf %3, %3 : vector<128x128xf32>
    %cst = arith.constant 1.000000e+00 : f32
    %6 = vector.broadcast %cst : f32 to vector<1x128xf32>
    %cst_4 = arith.constant dense<0.000000e+00> : vector<1x128xf32>
    %7 = tpu.matmul %6, %5, %cst_4 {dimension_numbers = #tpu.dot_dimension_numbers<[1], [1], [0], [0], [0, 0, 1, 0], [], []>} : vector<1x128xf32>, vector<128x128xf32>, vector<1x128xf32> -> vector<1x128xf32>
    %8 = math.sqrt %7 : vector<1x128xf32>
    %cst_5 = arith.constant 9.99999996E-13 : f32
    %9 = vector.broadcast %cst_5 : f32 to vector<1x128xf32>
    %10 = arith.maximumf %8, %9 : vector<1x128xf32>
    %cst_6 = arith.constant 1.000000e+00 : f32
    %11 = vector.broadcast %cst_6 : f32 to vector<1x128xf32>
    %12 = arith.divf %11, %10 : vector<1x128xf32>
    %cst_7 = arith.constant dense<0.000000e+00> : vector<4x128xf32>
    %13 = tpu.matmul %4, %3, %cst_7 {dimension_numbers = #tpu.dot_dimension_numbers<[1], [1], [0], [0], [0, 0, 1, 0], [], []>} : vector<4x128xf32>, vector<128x128xf32>, vector<4x128xf32> -> vector<4x128xf32>
    %14 = vector.broadcast %12 : vector<1x128xf32> to vector<4x128xf32>
    %15 = arith.mulf %13, %14 : vector<4x128xf32>
    %cst_8 = arith.constant 5.000000e-01 : f32
    %16 = vector.broadcast %cst_8 : f32 to vector<4x128xf32>
    %17 = arith.mulf %16, %15 : vector<4x128xf32>
    %cst_9 = arith.constant 5.000000e-01 : f32
    %18 = vector.broadcast %cst_9 : f32 to vector<4x128xf32>
    %19 = arith.subf %18, %17 : vector<4x128xf32>
    %cst_10 = arith.constant 0.000000e+00 : f32
    %cst_11 = arith.constant 1.000000e+00 : f32
    %20 = vector.broadcast %cst_10 : f32 to vector<4x128xf32>
    %21 = arith.maximumf %20, %19 : vector<4x128xf32>
    %22 = vector.broadcast %cst_11 : f32 to vector<4x128xf32>
    %23 = arith.minimumf %22, %21 : vector<4x128xf32>
    %24 = math.sqrt %23 : vector<4x128xf32>
    %cst_12 = arith.constant 5.000000e-01 : f32
    %25 = vector.broadcast %cst_12 : f32 to vector<4x128xf32>
    %26 = arith.cmpf olt, %24, %25 : vector<4x128xf32>
    %27 = arith.mulf %24, %24 : vector<4x128xf32>
    %cst_13 = arith.constant 1.000000e+00 : f32
    %28 = vector.broadcast %cst_13 : f32 to vector<4x128xf32>
    %29 = arith.subf %28, %24 : vector<4x128xf32>
    %cst_14 = arith.constant 5.000000e-01 : f32
    %30 = vector.broadcast %cst_14 : f32 to vector<4x128xf32>
    %31 = arith.mulf %29, %30 : vector<4x128xf32>
    %32 = arith.select %26, %27, %31 : vector<4x128xi1>, vector<4x128xf32>
    %cst_15 = arith.constant 3.47933092E-5 : f32
    %33 = vector.broadcast %cst_15 : f32 to vector<4x128xf32>
    %34 = arith.mulf %32, %33 : vector<4x128xf32>
    %cst_16 = arith.constant 7.915350e-04 : f32
    %35 = vector.broadcast %cst_16 : f32 to vector<4x128xf32>
    %36 = arith.addf %35, %34 : vector<4x128xf32>
    %37 = arith.mulf %32, %36 : vector<4x128xf32>
    %cst_17 = arith.constant -0.0400555357 : f32
    %38 = vector.broadcast %cst_17 : f32 to vector<4x128xf32>
    %39 = arith.addf %38, %37 : vector<4x128xf32>
    %40 = arith.mulf %32, %39 : vector<4x128xf32>
    %cst_18 = arith.constant 0.201212525 : f32
    %41 = vector.broadcast %cst_18 : f32 to vector<4x128xf32>
    %42 = arith.addf %41, %40 : vector<4x128xf32>
    %43 = arith.mulf %32, %42 : vector<4x128xf32>
    %cst_19 = arith.constant -0.325565815 : f32
    %44 = vector.broadcast %cst_19 : f32 to vector<4x128xf32>
    %45 = arith.addf %44, %43 : vector<4x128xf32>
    %46 = arith.mulf %32, %45 : vector<4x128xf32>
    %cst_20 = arith.constant 0.166666672 : f32
    %47 = vector.broadcast %cst_20 : f32 to vector<4x128xf32>
    %48 = arith.addf %47, %46 : vector<4x128xf32>
    %49 = arith.mulf %32, %48 : vector<4x128xf32>
    %cst_21 = arith.constant 0.077038154 : f32
    %50 = vector.broadcast %cst_21 : f32 to vector<4x128xf32>
    %51 = arith.mulf %32, %50 : vector<4x128xf32>
    %cst_22 = arith.constant -0.688283979 : f32
    %52 = vector.broadcast %cst_22 : f32 to vector<4x128xf32>
    %53 = arith.addf %52, %51 : vector<4x128xf32>
    %54 = arith.mulf %32, %53 : vector<4x128xf32>
    %cst_23 = arith.constant 2.02094579 : f32
    %55 = vector.broadcast %cst_23 : f32 to vector<4x128xf32>
    %56 = arith.addf %55, %54 : vector<4x128xf32>
    %57 = arith.mulf %32, %56 : vector<4x128xf32>
    %cst_24 = arith.constant -2.40339494 : f32
    %58 = vector.broadcast %cst_24 : f32 to vector<4x128xf32>
    %59 = arith.addf %58, %57 : vector<4x128xf32>
    %60 = arith.mulf %32, %59 : vector<4x128xf32>
    %cst_25 = arith.constant 1.000000e+00 : f32
    %61 = vector.broadcast %cst_25 : f32 to vector<4x128xf32>
    %62 = arith.addf %61, %60 : vector<4x128xf32>
    %63 = tpu.reciprocal %62 {approx = true} : vector<4x128xf32> -> vector<4x128xf32>
    %64 = arith.mulf %62, %63 : vector<4x128xf32>
    %cst_26 = arith.constant 2.000000e+00 : f32
    %65 = vector.broadcast %cst_26 : f32 to vector<4x128xf32>
    %66 = arith.subf %65, %64 : vector<4x128xf32>
    %67 = arith.mulf %63, %66 : vector<4x128xf32>
    %68 = arith.mulf %49, %67 : vector<4x128xf32>
    %69 = math.sqrt %32 : vector<4x128xf32>
    %70 = arith.mulf %24, %68 : vector<4x128xf32>
    %71 = arith.addf %24, %70 : vector<4x128xf32>
    %72 = arith.mulf %69, %68 : vector<4x128xf32>
    %73 = arith.addf %69, %72 : vector<4x128xf32>
    %cst_27 = arith.constant 2.000000e+00 : f32
    %74 = vector.broadcast %cst_27 : f32 to vector<4x128xf32>
    %75 = arith.mulf %74, %73 : vector<4x128xf32>
    %cst_28 = arith.constant 1.57079637 : f32
    %76 = vector.broadcast %cst_28 : f32 to vector<4x128xf32>
    %77 = arith.subf %76, %75 : vector<4x128xf32>
    %78 = arith.select %26, %71, %77 : vector<4x128xi1>, vector<4x128xf32>
    %79 = arith.mulf %78, %78 : vector<4x128xf32>
    %cst_29 = arith.constant 2.000000e+00 : f32
    %80 = vector.broadcast %cst_29 : f32 to vector<4x128xf32>
    %81 = arith.mulf %80, %79 : vector<4x128xf32>
    %c0_30 = arith.constant 0 : index
    %c0_31 = arith.constant 0 : index
    %82 = vector.load %arg5[%c0_30, %c0_31] : memref<1x128xf32, #tpu.memory_space<vmem>>, vector<1x128xf32>
    %cst_32 = arith.constant dense<0.000000e+00> : vector<128xf32>
    %83 = vector.multi_reduction <add>, %81, %cst_32 [0] : vector<4x128xf32> to vector<128xf32>
    %84 = vector.shape_cast %83 : vector<128xf32> to vector<1x128xf32>
    %85 = arith.addf %82, %84 : vector<1x128xf32>
    %c0_33 = arith.constant 0 : index
    %c0_34 = arith.constant 0 : index
    %86 = vector.load %arg5[%c0_33, %c0_34] : memref<1x128xf32, #tpu.memory_space<vmem>>, vector<1x128xf32>
    tpu.vector_store %arg5[%c0_33, %c0_34], %85 {strides = array<i32>} : memref<1x128xf32, #tpu.memory_space<vmem>>, vector<1x128xf32>,
    %c0_i32_35 = arith.constant 0 : i32
    %87 = arith.cmpi eq, %arg1, %c0_i32_35 : i32
    %88 = arith.extui %87 : i1 to i32
    %c0_i32_36 = arith.constant 0 : i32
    %89 = arith.cmpi ne, %88, %c0_i32_36 : i32
    scf.if %89 {
      %cst_37 = arith.constant 0.000000e+00 : f32
      %90 = vector.broadcast %cst_37 : f32 to vector<8x128xf32>
      %c0_38 = arith.constant 0 : index
      %c0_39 = arith.constant 0 : index
      %91 = vector.load %arg5[%c0_38, %c0_39] : memref<1x128xf32, #tpu.memory_space<vmem>>, vector<1x128xf32>
      %92 = vector.shape_cast %91 : vector<1x128xf32> to vector<1x1x128xf32>
      %cst_40 = arith.constant dense<0.000000e+00> : vector<1xf32>
      %93 = vector.multi_reduction <add>, %92, %cst_40 [1, 2] : vector<1x1x128xf32> to vector<1xf32>
      %94 = vector.shape_cast %93 : vector<1xf32> to vector<1x1x1xf32>
      %95 = vector.extract %94[0, 0, 0] : f32 from vector<1x1x1xf32>
      %96 = vector.broadcast %95 : f32 to vector<8x128xf32>
      %97 = arith.addf %90, %96 : vector<8x128xf32>
      %c0_41 = arith.constant 0 : index
      %c0_42 = arith.constant 0 : index
      %98 = vector.load %arg4[%c0_41, %c0_42] : memref<8x128xf32, #tpu.memory_space<vmem>>, vector<8x128xf32>
      tpu.vector_store %arg4[%c0_41, %c0_42], %97 {strides = array<i32>} : memref<8x128xf32, #tpu.memory_space<vmem>>, vector<8x128xf32>,
    } else {
    }
    return
  }
  func.func @transform_0(%arg0: i32, %arg1: i32) -> (i32, i32) {
    %c1_i32 = arith.constant 1 : i32
    %0 = arith.muli %arg0, %c1_i32 : i32
    %1 = arith.addi %0, %arg1 : i32
    %c0_i32 = arith.constant 0 : i32
    %c0_i32_0 = arith.constant 0 : i32
    return %1, %c0_i32 : i32, i32
  }
  func.func @transform_1(%arg0: i32, %arg1: i32) -> (i32, i32) {
    %c0_i32 = arith.constant 0 : i32
    %c0_i32_0 = arith.constant 0 : i32
    %c0_i32_1 = arith.constant 0 : i32
    return %c0_i32, %c0_i32_0 : i32, i32
  }
  func.func @transform_2(%arg0: i32, %arg1: i32) -> (i32, i32) {
    %c0_i32 = arith.constant 0 : i32
    %c0_i32_0 = arith.constant 0 : i32
    return %arg0, %c0_i32 : i32, i32
  }
}

</mosaic_0001>

<llo_original>
// kernel: tpu_custom_call.1
$region0: #{tpu_custom_call.1}
  #allocation0 [shape = 'u32[]', space=smem, size = 0x4, offset = 0x4, fixed_abs, tag = 'smem constant byte address 0x4 - core index']
  #allocation1 [shape = 'u32[144,128]{1,0:T(1,128)}', space=vmem, size = 0x12000, scoped, tag = 'internal scratch']
  #allocation2 [shape = 'f32[1,128]{1,0:T(1,128)}', space=vmem, size = 0x200, scoped, tag = 'scratch operand']
  %s0 = inlined_call_operand.hbm [shape: f32[256,128], index: 0, kind: input, shape index: {}]
  %s1 = inlined_call_operand.hbm [shape: f32[4,128], index: 1, kind: input, shape index: {}]
  %s2 = inlined_call_operand.hbm [shape: f32[16,128], index: 2, kind: output, shape index: {}]
  %s3 = sld [smem:[#allocation0]]
  $region57: #{tpu_custom_call.1} parent=0
    _
  %s5 = ssub.s32 1, %s3
  %s6 = scalar_select 0, %s5, %s3
  $region1: #{tpu_custom_call.1} parent=0
    #allocation3 [shape = 'u8[131072]{0}', space=vmem, size = 0x20000, scoped, tag = 'input window, operand 0']
    #allocation4 [shape = 's32[2]{0}', space=sflag, size = 0x8, scoped, tag = 'scoped memory for tpu_custom_call.1']
    #allocation5 [shape = 's32[2]{0}', space=sflag, size = 0x8, scoped, tag = 'scoped memory for tpu_custom_call.1']
    #allocation6 [shape = 'u8[2048]{0}', space=vmem, size = 0x800, scoped, tag = 'input window, operand 1, single buffered']
    #allocation7 [shape = 's32[1]{0}', space=sflag, size = 0x4, scoped, tag = 'scoped memory for tpu_custom_call.1']
    #allocation8 [shape = 'u8[8192]{0}', space=vmem, size = 0x2000, scoped, tag = 'output window, operand 0']
    %7 = vsyncpa [#allocation4], 0
    %s8 = scalar_lea.sflag [#allocation4], 1
    %9 = vsyncpa %s8, 0
    %10 = vsyncpa [#allocation7], 0
    %11 = vsyncpa [#allocation5], 0
    %s12 = scalar_lea.sflag [#allocation5], 1
    %13 = vsyncpa %s12, 0
    loop: start=0, step=1, limit=4
    $region2: #{tpu_custom_call.1} parent=1 // loop_pre_header
      _
    $region3: #{tpu_custom_call.1} parent=1 // loop_header
      %s15 = sphi 0, %s19
      %p16 = scmp.ge.s32.totalorder %s15, 4
      %s22 = sphi 0, %s34
      %s23 = sphi 0, %s30
      %s24 = sphi 0, %s22
      %s25 = sphi 0, %s23
      %s26 = sphi 0, %s24
      %s27 = sphi 0, %s25
      %s39 = sphi 0, %s41
      %s42 = sphi 0, %s39
      %s43 = sphi 0, %s42
      %s59 = sphi 0, %s43
      %s63 = sphi 0, %s63
      %s65 = sphi 0, %s63
      %s66 = sphi 0, %s65
      %s80 = sphi 0, %s66
      %s86 = sphi 0, %s88
      %s89 = sphi 0, %s86
      %s90 = sphi 0, %s89
      %s106 = sphi 0, %s90
    $region4: #{tpu_custom_call.1} parent=1 // loop_header_branch
      %18 = sbr.rel (%p16) target = $region8
    $region5: #{tpu_custom_call.1} parent=1 // loop_body
      %s20 = ssub.s32 %s15, 1
      %s21 = ssub.s32 %s15, 2
      %s28 = sadd.s32 1, %s23
      %p29 = scmp.ge.s32.totalorder %s28, 1
      %s30 = scalar_select %p29, 0, %s28
      %s31 = sadd.s32 1, %s22
      %s32 = scalar_select %p29, %s31, %s22
      %p33 = scmp.ge.s32.totalorder %s32, 2
      %s34 = scalar_select %p33, 0, %s32
      %s35 = sadd.s32 %s22, %s23
      %s36 = sadd.s32 %s34, %s30
      %s37 = ssub.s32 %s35, %s36
      %p38 = scmp.eq.s32.totalorder %s37, 0
      %s40 = sadd.s32 %s39, 1
      %s41 = scalar_select %p38, %s39, %s40
      %p44 = pneg %p38
      %p45 = scmp.eq.s32.totalorder %s15, 1
      %p46 = por %p44, %p45
      %p47 = scmp.ne.s32.totalorder %s39, %s42
      %p48 = scmp.eq.s32.totalorder %s15, 0
      %p49 = por %p47, %p48
      %p50 = scmp.ne.s32.totalorder %s39, %s42
      %p51 = scmp.eq.s32.totalorder %s20, 1
      %p52 = por %p50, %p51
      %p53 = scmp.ne.s32.totalorder %s42, %s43
      %p54 = scmp.eq.s32.totalorder %s20, 0
      %p55 = por %p53, %p54
      %p56 = scmp.ne.s32.totalorder %s42, %s43
      %p57 = scmp.eq.s32.totalorder %s21, 1
      %p58 = por %p56, %p57
      %p60 = scmp.ne.s32.totalorder %s43, %s59
      %p61 = scmp.eq.s32.totalorder %s21, 0
      %p62 = por %p60, %p61
      %s64 = sadd.s32 %s63, 1
      %p67 = scmp.eq.s32.totalorder %s15, 1
      %p68 = scmp.ne.s32.totalorder %s63, %s65
      %p69 = scmp.eq.s32.totalorder %s15, 0
      %p70 = por %p68, %p69
      %p71 = scmp.ne.s32.totalorder %s63, %s65
      %p72 = scmp.eq.s32.totalorder %s20, 1
      %p73 = por %p71, %p72
      %p74 = scmp.ne.s32.totalorder %s65, %s66
      %p75 = scmp.eq.s32.totalorder %s20, 0
      %p76 = por %p74, %p75
      %p77 = scmp.ne.s32.totalorder %s65, %s66
      %p78 = scmp.eq.s32.totalorder %s21, 1
      %p79 = por %p77, %p78
      %p81 = scmp.ne.s32.totalorder %s66, %s80
      %p82 = scmp.eq.s32.totalorder %s21, 0
      %p83 = por %p81, %p82
      %s84 = ssub.s32 %s22, %s34
      %p85 = scmp.eq.s32.totalorder %s84, 0
      %s87 = sadd.s32 %s86, 1
      %s88 = scalar_select %p85, %s86, %s87
      %p91 = pneg %p85
      %p92 = scmp.eq.s32.totalorder %s15, 1
      %p93 = por %p91, %p92
      %p94 = scmp.ne.s32.totalorder %s86, %s89
      %p95 = scmp.eq.s32.totalorder %s15, 0
      %p96 = por %p94, %p95
      %p97 = scmp.ne.s32.totalorder %s86, %s89
      %p98 = scmp.eq.s32.totalorder %s20, 1
      %p99 = por %p97, %p98
      %p100 = scmp.ne.s32.totalorder %s89, %s90
      %p101 = scmp.eq.s32.totalorder %s20, 0
      %p102 = por %p100, %p101
      %p103 = scmp.ne.s32.totalorder %s89, %s90
      %p104 = scmp.eq.s32.totalorder %s21, 1
      %p105 = por %p103, %p104
      %p107 = scmp.ne.s32.totalorder %s90, %s106
      %p108 = scmp.eq.s32.totalorder %s21, 0
      %p109 = por %p107, %p108
      %p110 = scmp.le.s32.totalorder 1, %s15
      %p111 = scmp.lt.s32.totalorder %s15, 3
      %p112 = pnand %p110, %p111
      %p113 = pneg %p112
      // Predicated region
      $region9: #{tpu_custom_call.1} parent=5 // pred_check
        _
      $region10: #{tpu_custom_call.1} parent=5 // pred_check_branch
        %115 = sbr.rel (%p112) target = $region12
      $region11: #{tpu_custom_call.1} parent=5 // pred_region
        %s116 = ssub.s32 %s15, 1
        // Predicated region
        $region13: #{tpu_custom_call.1} parent=11 // pred_check
          %p117 = pneg %p76
        $region14: #{tpu_custom_call.1} parent=11 // pred_check_branch
          %119 = sbr.rel (%p117) target = $region16
        $region15: #{tpu_custom_call.1} parent=11 // pred_region
          %s121 = ssub.s32 64, 64
          %122 = vsyncadd [#allocation7], %s121
          %s124 = sshll.u32 [#allocation6], 4
          %s125 = int_to_ptr.vmem [resolvable:$true] %s124
          %127 = dma.hbm_to_vmem [thread:$0]  %s1, 64, %s125, [#allocation7]
        $region16: #{tpu_custom_call.1} parent=11 // pred_fallthru
          _
      $region12: #{tpu_custom_call.1} parent=5 // pred_fallthru
        _
      %p128 = scmp.lt.s32.totalorder %s15, 2
      // Predicated region
      $region17: #{tpu_custom_call.1} parent=5 // pred_check
        %p129 = pneg %p128
      $region18: #{tpu_custom_call.1} parent=5 // pred_check_branch
        %131 = sbr.rel (%p129) target = $region20
      $region19: #{tpu_custom_call.1} parent=5 // pred_region
        // Predicated region
        $region21: #{tpu_custom_call.1} parent=19 // pred_check
          %p132 = pneg %p49
        $region22: #{tpu_custom_call.1} parent=19 // pred_check_branch
          %134 = sbr.rel (%p132) target = $region24
        $region23: #{tpu_custom_call.1} parent=19 // pred_region
          %s135 = sand.u32 %s39, 1
          %s136 = scalar_lea.sflag [#allocation4], %s135
          %s137 = sand.u32 %s39, 1
          %s138 = smul.addr %s137, 128
          %s139 = scalar_lea.vmem [#allocation3], %s138
          %s140 = sadd.s32 %s22, %s23
          %s141 = smul.u32 16, %s140
          %s143 = ssub.s32 2048, 2048
          %144 = vsyncadd %s136, %s143
          %s145 = smul.addr %s141, 128
          %s146 = scalar_lea.hbm %s0, %s145
          %s147 = sshll.u32 %s139, 4
          %s148 = int_to_ptr.vmem [resolvable:$true] %s147
          %153 = dma.hbm_to_vmem [thread:$0]  %s146, 2048, %s148, %s136, 128, 128, 8
        $region24: #{tpu_custom_call.1} parent=19 // pred_fallthru
          _
      $region20: #{tpu_custom_call.1} parent=5 // pred_fallthru
        _
      %p154 = scmp.le.s32.totalorder 1, %s15
      %p155 = scmp.lt.s32.totalorder %s15, 3
      %p156 = pnand %p154, %p155
      %p157 = pneg %p156
      // Predicated region
      $region25: #{tpu_custom_call.1} parent=5 // pred_check
        _
      $region26: #{tpu_custom_call.1} parent=5 // pred_check_branch
        %159 = sbr.rel (%p156) target = $region28
      $region27: #{tpu_custom_call.1} parent=5 // pred_region
        %s160 = ssub.s32 %s15, 1
        %s161 = sand.u32 %s42, 1
        %s162 = scalar_lea.sflag [#allocation4], %s161
        %s163 = sand.u32 %s42, 1
        %s164 = smul.addr %s163, 128
        %s165 = scalar_lea.vmem [#allocation3], %s164
        // Predicated region
        $region29: #{tpu_custom_call.1} parent=27 // pred_check
          %p166 = pneg %p55
        $region30: #{tpu_custom_call.1} parent=27 // pred_check_branch
          %168 = sbr.rel (%p166) target = $region32
        $region31: #{tpu_custom_call.1} parent=27 // pred_region
          %169 = dma.done %s162, 2048
        $region32: #{tpu_custom_call.1} parent=27 // pred_fallthru
          _
        // Predicated region
        $region33: #{tpu_custom_call.1} parent=27 // pred_check
          %p170 = pneg %p76
        $region34: #{tpu_custom_call.1} parent=27 // pred_check_branch
          %172 = sbr.rel (%p170) target = $region36
        $region35: #{tpu_custom_call.1} parent=27 // pred_region
          %173 = dma.done [#allocation7], 64
        $region36: #{tpu_custom_call.1} parent=27 // pred_fallthru
          _
        %s174 = sand.u32 %s42, 1
        %s175 = scalar_lea.sflag [#allocation4], %s174
        %s176 = sand.u32 %s42, 1
        %s177 = smul.addr %s176, 128
        %s178 = scalar_lea.vmem [#allocation3], %s177
        %p179 = pneg %p55
        %p180 = pneg %p52
        %p181 = pneg %p76
        %p182 = pneg %p73
        %p183 = pneg %p102
        %p184 = pneg %p99
        %s185 = sand.u32 %s89, 1
        %s186 = scalar_lea.sflag [#allocation5], %s185
        %s187 = sand.u32 %s89, 1
        %s188 = smul.addr %s187, 8
        %s189 = scalar_lea.vmem [#allocation8], %s188
        %s190 = sadd.s32 %s24, %s25
        %s191 = smul.u32 16, %s190
        %p192 = scmp.eq.s32.totalorder %s25, 0
        // Predicated region
        $region37: #{tpu_custom_call.1} parent=27 // pred_check
          %p193 = pneg %p192
        $region38: #{tpu_custom_call.1} parent=27 // pred_check_branch
          %195 = sbr.rel (%p193) target = $region40
        $region39: #{tpu_custom_call.1} parent=27 // pred_region
          %196 = vst [vmem:[#allocation2] sm:$0x1] 0.0
        $region40: #{tpu_custom_call.1} parent=27 // pred_fallthru
          _
        %v197 = vld [vmem:[%s165] sm:$0xff]
        %v198 = vld [vmem:[%s165 + $0x8] sm:$0xff]
        %v199 = vld [vmem:[%s165 + $0x10] sm:$0xff]
        %v200 = vld [vmem:[%s165 + $0x18] sm:$0xff]
        %v201 = vld [vmem:[%s165 + $0x20] sm:$0xff]
        %v202 = vld [vmem:[%s165 + $0x28] sm:$0xff]
        %v203 = vld [vmem:[%s165 + $0x30] sm:$0xff]
        %v204 = vld [vmem:[%s165 + $0x38] sm:$0xff]
        %v205 = vld [vmem:[%s165 + $0x40] sm:$0xff]
        %v206 = vld [vmem:[%s165 + $0x48] sm:$0xff]
        %v207 = vld [vmem:[%s165 + $0x50] sm:$0xff]
        %v208 = vld [vmem:[%s165 + $0x58] sm:$0xff]
        %v209 = vld [vmem:[%s165 + $0x60] sm:$0xff]
        %v210 = vld [vmem:[%s165 + $0x68] sm:$0xff]
        %v211 = vld [vmem:[%s165 + $0x70] sm:$0xff]
        %v212 = vld [vmem:[%s165 + $0x78] sm:$0xff]
        %v213 = vld [vmem:[#allocation6] sm:$0xf]
        %v214 = vmul.f32 %v197, %v197
        %v215 = vmul.f32 %v198, %v198
        %v216 = vmul.f32 %v199, %v199
        %v217 = vmul.f32 %v200, %v200
        %v218 = vmul.f32 %v201, %v201
        %v219 = vmul.f32 %v202, %v202
        %v220 = vmul.f32 %v203, %v203
        %v221 = vmul.f32 %v204, %v204
        %v222 = vmul.f32 %v205, %v205
        %v223 = vmul.f32 %v206, %v206
        %v224 = vmul.f32 %v207, %v207
        %v225 = vmul.f32 %v208, %v208
        %v226 = vmul.f32 %v209, %v209
        %v227 = vmul.f32 %v210, %v210
        %v228 = vmul.f32 %v211, %v211
        %v229 = vmul.f32 %v212, %v212
        %230 = vmatprep.subr.mxu0 0.0
        %231 = vmatpush1.xpose.msra.mxu0 %v214
        %232 = vmatprep.subr.mxu0 0.0
        %233 = vmatpush1.xpose.msra.mxu0 %v215
        %234 = vmatprep.subr.mxu0 0.0
        %235 = vmatpush1.xpose.msra.mxu0 %v216
        %236 = vmatprep.subr.mxu0 0.0
        %237 = vmatpush1.xpose.msra.mxu0 %v217
        %238 = vmatprep.subr.mxu0 0.0
        %239 = vmatpush1.xpose.msra.mxu0 %v218
        %240 = vmatprep.subr.mxu0 0.0
        %241 = vmatpush1.xpose.msra.mxu0 %v219
        %242 = vmatprep.subr.mxu0 0.0
        %243 = vmatpush1.xpose.msra.mxu0 %v220
        %244 = vmatprep.subr.mxu0 0.0
        %245 = vmatpush1.xpose.msra.mxu0 %v221
        %246 = vmatprep.subr.mxu0 0.0
        %247 = vmatpush1.xpose.msra.mxu0 %v222
        %248 = vmatprep.subr.mxu0 0.0
        %249 = vmatpush1.xpose.msra.mxu0 %v223
        %250 = vmatprep.subr.mxu0 0.0
        %251 = vmatpush1.xpose.msra.mxu0 %v224
        %252 = vmatprep.subr.mxu0 0.0
        %253 = vmatpush1.xpose.msra.mxu0 %v225
        %254 = vmatprep.subr.mxu0 0.0
        %255 = vmatpush1.xpose.msra.mxu0 %v226
        %256 = vmatprep.subr.mxu0 0.0
        %257 = vmatpush1.xpose.msra.mxu0 %v227
        %258 = vmatprep.subr.mxu0 0.0
        %259 = vmatpush1.xpose.msra.mxu0 %v228
        %260 = vmatprep.subr.mxu0 0.0
        %261 = vmatpush1.xpose.msra.mxu0 %v229
        %262 = vmatprep.subr.mxu0 0.0
        %263 = vmatpush1.xpose.msra.mxu0 0.0
        %264 = vmatprep.subr.mxu0 0.0
        %265 = vmatpush1.xpose.msra.mxu0 0.0
        %266 = vmatprep.subr.mxu0 0.0
        %267 = vmatpush1.xpose.msra.mxu0 0.0
        %268 = vmatprep.subr.mxu0 0.0
        %269 = vmatpush1.xpose.msra.mxu0 0.0
        %270 = vmatprep.subr.mxu0 0.0
        %271 = vmatpush1.xpose.msra.mxu0 0.0
        %272 = vmatprep.subr.mxu0 0.0
        %273 = vmatpush1.xpose.msra.mxu0 0.0
        %274 = vmatprep.subr.mxu0 0.0
        %275 = vmatpush1.xpose.msra.mxu0 0.0
        %276 = vmatprep.subr.mxu0 0.0
        %277 = vmatpush1.xpose.msra.mxu0 0.0
        %278 = vmatprep.subr.mxu0 0.0
        %279 = vmatpush1.xpose.msra.mxu0 0.0
        %280 = vmatprep.subr.mxu0 0.0
        %281 = vmatpush1.xpose.msra.mxu0 0.0
        %282 = vmatprep.subr.mxu0 0.0
        %283 = vmatpush1.xpose.msra.mxu0 0.0
        %284 = vmatprep.subr.mxu0 0.0
        %285 = vmatpush1.xpose.msra.mxu0 0.0
        %286 = vmatprep.subr.mxu0 0.0
        %287 = vmatpush1.xpose.msra.mxu0 0.0
        %288 = vmatprep.subr.mxu0 0.0
        %289 = vmatpush1.xpose.msra.mxu0 0.0
        %290 = vmatprep.subr.mxu0 0.0
        %291 = vmatpush1.xpose.msra.mxu0 0.0
        %292 = vmatprep.subr.mxu0 0.0
        %293 = vmatpush1.xpose.msra.mxu0 0.0
        %294 = vmatprep.mubr.f32.mxu0 0.0
        %295 = vmatmul.mubr.f32.gmra.mrb[0].mxu0 1.0
        %v296 = vpop.f32.mrb[0].mxu0
        %v297 = vadd.f32 0.0, %v296
        %v298 = vpop.f32.mrb[0].mxu0
        %299 = vdwg.mxu0
        %v300 = vrsqrt.pop %v297
        %v301 = vmul.f32 %v297, %v300
        %vm302 = vcmp.eq.f32.partialorder %v297, inf
        %v303 = vsel %vm302, %v297, %v301
        %vm304 = vcmp.eq.f32.partialorder %v297, 0.0
        %v305 = vand.u32 %v297, 2147483648
        %v306 = vsel %vm304, %v305, %v303
        %v307 = vmax.f32 %v306, 1e-12
        %v308 = vrcp.pop %v307
        %v309 = vmul.f32 1.0, %v308
        %310 = vmatprep.subr.mxu0 0.0
        %311 = vmatpush1.xpose.msra.mxu0 %v197
        %312 = vmatprep.subr.mxu0 0.0
        %313 = vmatpush1.xpose.msra.mxu0 %v198
        %314 = vmatprep.subr.mxu0 0.0
        %315 = vmatpush1.xpose.msra.mxu0 %v199
        %316 = vmatprep.subr.mxu0 0.0
        %317 = vmatpush1.xpose.msra.mxu0 %v200
        %318 = vmatprep.subr.mxu0 0.0
        %319 = vmatpush1.xpose.msra.mxu0 %v201
        %320 = vmatprep.subr.mxu0 0.0
        %321 = vmatpush1.xpose.msra.mxu0 %v202
        %322 = vmatprep.subr.mxu0 0.0
        %323 = vmatpush1.xpose.msra.mxu0 %v203
        %324 = vmatprep.subr.mxu0 0.0
        %325 = vmatpush1.xpose.msra.mxu0 %v204
        %326 = vmatprep.subr.mxu0 0.0
        %327 = vmatpush1.xpose.msra.mxu0 %v205
        %328 = vmatprep.subr.mxu0 0.0
        %329 = vmatpush1.xpose.msra.mxu0 %v206
        %330 = vmatprep.subr.mxu0 0.0
        %331 = vmatpush1.xpose.msra.mxu0 %v207
        %332 = vmatprep.subr.mxu0 0.0
        %333 = vmatpush1.xpose.msra.mxu0 %v208
        %334 = vmatprep.subr.mxu0 0.0
        %335 = vmatpush1.xpose.msra.mxu0 %v209
        %336 = vmatprep.subr.mxu0 0.0
        %337 = vmatpush1.xpose.msra.mxu0 %v210
        %338 = vmatprep.subr.mxu0 0.0
        %339 = vmatpush1.xpose.msra.mxu0 %v211
        %340 = vmatprep.subr.mxu0 0.0
        %341 = vmatpush1.xpose.msra.mxu0 %v212
        %342 = vmatprep.subr.mxu0 0.0
        %343 = vmatpush1.xpose.msra.mxu0 0.0
        %344 = vmatprep.subr.mxu0 0.0
        %345 = vmatpush1.xpose.msra.mxu0 0.0
        %346 = vmatprep.subr.mxu0 0.0
        %347 = vmatpush1.xpose.msra.mxu0 0.0
        %348 = vmatprep.subr.mxu0 0.0
        %349 = vmatpush1.xpose.msra.mxu0 0.0
        %350 = vmatprep.subr.mxu0 0.0
        %351 = vmatpush1.xpose.msra.mxu0 0.0
        %352 = vmatprep.subr.mxu0 0.0
        %353 = vmatpush1.xpose.msra.mxu0 0.0
        %354 = vmatprep.subr.mxu0 0.0
        %355 = vmatpush1.xpose.msra.mxu0 0.0
        %356 = vmatprep.subr.mxu0 0.0
        %357 = vmatpush1.xpose.msra.mxu0 0.0
        %358 = vmatprep.subr.mxu0 0.0
        %359 = vmatpush1.xpose.msra.mxu0 0.0
        %360 = vmatprep.subr.mxu0 0.0
        %361 = vmatpush1.xpose.msra.mxu0 0.0
        %362 = vmatprep.subr.mxu0 0.0
        %363 = vmatpush1.xpose.msra.mxu0 0.0
        %364 = vmatprep.subr.mxu0 0.0
        %365 = vmatpush1.xpose.msra.mxu0 0.0
        %366 = vmatprep.subr.mxu0 0.0
        %367 = vmatpush1.xpose.msra.mxu0 0.0
        %368 = vmatprep.subr.mxu0 0.0
        %369 = vmatpush1.xpose.msra.mxu0 0.0
        %370 = vmatprep.subr.mxu0 0.0
        %371 = vmatpush1.xpose.msra.mxu0 0.0
        %372 = vmatprep.subr.mxu0 0.0
        %373 = vmatpush1.xpose.msra.mxu0 0.0
        %374 = vmatprep.mubr.f32.mxu0 0.0
        %375 = vmatmul.mubr.f32.gmra.mrb[0].mxu0 %v213
        %v376 = vpop.f32.mrb[0].mxu0
        %v377 = vadd.f32 0.0, %v376
        %v378 = vpop.f32.mrb[0].mxu0
        %379 = vdwg.mxu0
        %v380 = vlaneseq
        %v381 = vshrl.u32 %v380, 7
        %v382 = vsub.s32 0, %v381
        %v383 = vrot.slane %v309, %v382
        %v384 = vmul.f32 %v377, %v383
        %v385 = vmul.f32 %v384, 0.5
        %v386 = vsub.f32 0.5, %v385
        %v387 = vmax.f32 %v386, 0.0
        %v388 = vmin.f32 %v387, 1.0
        %v389 = vrsqrt.pop %v388
        %v390 = vmul.f32 %v388, %v389
        %vm391 = vcmp.eq.f32.partialorder %v388, inf
        %v392 = vsel %vm391, %v388, %v390
        %vm393 = vcmp.eq.f32.partialorder %v388, 0.0
        %v394 = vand.u32 %v388, 2147483648
        %v395 = vsel %vm393, %v394, %v392
        %vm396 = vcmp.lt.f32.partialorder %v395, 0.5
        %v397 = vmul.f32 %v395, %v395
        %v398 = vsub.f32 1.0, %v395
        %v399 = vmul.f32 %v398, 0.5
        %v400 = vsel %vm396, %v397, %v399
        %v401 = vmul.f32 %v400, 3.479331e-05
        %v402 = vadd.f32 %v401, 0.000791535
        %v403 = vmul.f32 %v400, %v402
        %v404 = vadd.f32 %v403, -0.040055536
        %v405 = vmul.f32 %v400, %v404
        %v406 = vadd.f32 %v405, 0.20121253
        %v407 = vmul.f32 %v400, %v406
        %v408 = vadd.f32 %v407, -0.32556581
        %v409 = vmul.f32 %v400, %v408
        %v410 = vadd.f32 %v409, 0.16666667
        %v411 = vmul.f32 %v400, %v410
        %v412 = vmul.f32 %v400, 0.077038154
        %v413 = vadd.f32 %v412, -0.688284
        %v414 = vmul.f32 %v400, %v413
        %v415 = vadd.f32 %v414, 2.0209458
        %v416 = vmul.f32 %v400, %v415
        %v417 = vadd.f32 %v416, -2.403395
        %v418 = vmul.f32 %v400, %v417
        %v419 = vadd.f32 %v418, 1.0
        %v420 = vrcp.pop %v419
        %v421 = vmul.f32 %v419, %v420
        %v422 = vsub.f32 2.0, %v421
        %v423 = vmul.f32 %v420, %v422
        %v424 = vmul.f32 %v411, %v423
        %v425 = vrsqrt.pop %v400
        %v426 = vmul.f32 %v400, %v425
        %vm427 = vcmp.eq.f32.partialorder %v400, inf
        %v428 = vsel %vm427, %v400, %v426
        %vm429 = vcmp.eq.f32.partialorder %v400, 0.0
        %v430 = vand.u32 %v400, 2147483648
        %v431 = vsel %vm429, %v430, %v428
        %v432 = vmul.f32 %v395, %v424
        %v433 = vadd.f32 %v395, %v432
        %v434 = vmul.f32 %v431, %v424
        %v435 = vadd.f32 %v431, %v434
        %v436 = vmul.f32 %v435, 2.0
        %v437 = vsub.f32 1.5707964, %v436
        %v438 = vsel %vm396, %v433, %v437
        %v439 = vmul.f32 %v438, %v438
        %v440 = vmul.f32 %v439, 2.0
        %v441 = vld [vmem:[#allocation2] sm:$0x1]
        %vm442 = vcmask 1043456
        %v443 = vsel %vm442, %v440, 0.0
        %v444 = vrot.slane %v443, 4
        %v445 = vadd.f32 %v443, %v444
        %v446 = vrot.slane %v445, 2
        %v447 = vadd.f32 %v445, %v446
        %v448 = vrot.slane %v447, 1
        %v449 = vadd.f32 %v447, %v448
        %v450 = vadd.f32 %v441, %v449
        %451 = vst [vmem:[#allocation2] sm:$0x1] %v450
        // Predicated region
        $region41: #{tpu_custom_call.1} parent=27 // pred_check
          %p452 = pneg %p192
        $region42: #{tpu_custom_call.1} parent=27 // pred_check_branch
          %454 = sbr.rel (%p452) target = $region44
        $region43: #{tpu_custom_call.1} parent=27 // pred_region
          %v455 = vld [vmem:[#allocation2] sm:$0x1]
          %vm456 = vcmask 1040384
          %v457 = vsel %vm456, %v455, 0.0
          %458 = vadd.xlane.f32.xlu0 %v457
          %v459 = vpop.xlane.xlu0 %458
          %v460 = vrot.slane %v459, 4
          %v461 = vadd.f32 %v459, %v460
          %v462 = vrot.slane %v461, 2
          %v463 = vadd.f32 %v461, %v462
          %v464 = vrot.slane %v463, 1
          %v465 = vadd.f32 %v463, %v464
          %s466 = vtos %v465
          %v467 = vstv %s466
          %v468 = vadd.f32 %v467, 0.0
          %469 = vst [vmem:[%s189] sm:$0xff] %v468
        $region44: #{tpu_custom_call.1} parent=27 // pred_fallthru
          _
        %s470 = sand.u32 %s89, 1
        %s471 = scalar_lea.sflag [#allocation5], %s470
        %s472 = sand.u32 %s89, 1
        %s473 = smul.addr %s472, 8
        %s474 = scalar_lea.vmem [#allocation8], %s473
        // Predicated region
        $region45: #{tpu_custom_call.1} parent=27 // pred_check
          %p475 = pneg %p99
        $region46: #{tpu_custom_call.1} parent=27 // pred_check_branch
          %477 = sbr.rel (%p475) target = $region48
        $region47: #{tpu_custom_call.1} parent=27 // pred_region
          %s479 = ssub.s32 128, 128
          %480 = vsyncadd %s471, %s479
          %s481 = smul.addr %s24, 128
          %s482 = scalar_lea.hbm %s2, %s481
          %s484 = sshll.u32 %s474, 4
          %s485 = int_to_ptr.vmem [resolvable:$true] %s484
          %487 = dma.vmem_to_hbm [thread:$0]  %s485, 128, %s482, %s471
        $region48: #{tpu_custom_call.1} parent=27 // pred_fallthru
          _
      $region28: #{tpu_custom_call.1} parent=5 // pred_fallthru
        _
      %p488 = scmp.le.s32.totalorder 2, %s15
      // Predicated region
      $region49: #{tpu_custom_call.1} parent=5 // pred_check
        %p489 = pneg %p488
      $region50: #{tpu_custom_call.1} parent=5 // pred_check_branch
        %491 = sbr.rel (%p489) target = $region52
      $region51: #{tpu_custom_call.1} parent=5 // pred_region
        %s492 = ssub.s32 %s15, 2
        // Predicated region
        $region53: #{tpu_custom_call.1} parent=51 // pred_check
          %p493 = pneg %p105
        $region54: #{tpu_custom_call.1} parent=51 // pred_check_branch
          %495 = sbr.rel (%p493) target = $region56
        $region55: #{tpu_custom_call.1} parent=51 // pred_region
          %s496 = sand.u32 %s90, 1
          %s497 = scalar_lea.sflag [#allocation5], %s496
          %s498 = sand.u32 %s90, 1
          %s499 = smul.addr %s498, 8
          %s500 = scalar_lea.vmem [#allocation8], %s499
          %501 = dma.done %s497, 128
        $region56: #{tpu_custom_call.1} parent=51 // pred_fallthru
          _
      $region52: #{tpu_custom_call.1} parent=5 // pred_fallthru
        _
    $region6: #{tpu_custom_call.1} parent=1 // loop_footer
      %s19 = sadd.s32 1, %s15
    $region7: #{tpu_custom_call.1} parent=1 // loop_footer_branch
      %14 = sbr.rel target = $region3
    $region8: #{tpu_custom_call.1} parent=1 // loop_exit
      _
    %502 = vsyncpa [#allocation4], 1
    %s503 = scalar_lea.sflag [#allocation4], 1
    %504 = vsyncpa %s503, 1
    %505 = vsyncpa [#allocation7], 1
    %506 = vsyncpa [#allocation5], 1
    %s507 = scalar_lea.sflag [#allocation5], 1
    %508 = vsyncpa %s507, 1

</llo_original>
